<compile_context>
chip_gen: v7x
topology: tpu7x:2x2x1
jax: 0.10.0
libtpu: 0.0.40
codegen_flags: <defaults>
</compile_context>

<pallas_src>
import math
from functools import partial

import jax
import jax.numpy as jnp
from jax.experimental import pallas as pl
from jax.experimental.pallas import tpu as pltpu


# ----------------------------- Pallas kernels -----------------------------

def _linear_bias_kernel(x_ref, w_ref, b_ref, o_ref):
    """One (row_tile, col_tile) output tile of y = x @ W + b (fp32 accumulation)."""
    acc = jnp.dot(x_ref[...], w_ref[...], preferred_element_type=jnp.float32)
    acc = acc + b_ref[...]                     # (1, col_tile) broadcasts over rows
    o_ref[...] = acc.astype(o_ref.dtype)


def _flash_attn_kernel(q_ref, k_ref, v_ref, o_ref, m_sc, l_sc, acc_sc, *,
                       sm_scale, block_q, block_k):
    """Causal flash-attention: one (bh, q_block) output tile, iterating kv blocks."""
    qi = pl.program_id(1)
    ki = pl.program_id(2)

    q_start = qi * block_q
    k_start = ki * block_k
    # Last kv block that intersects the causal region of this q block.
    last_k = (q_start + block_q - 1) // block_k
    in_range = ki <= last_k
    # Does this kv block straddle the diagonal (i.e. does it need masking)?
    needs_mask = (k_start + block_k - 1) > q_start

    @pl.when(ki == 0)
    def _init():
        m_sc[...] = jnp.full(m_sc.shape, -jnp.inf, dtype=m_sc.dtype)
        l_sc[...] = jnp.zeros(l_sc.shape, dtype=l_sc.dtype)
        acc_sc[...] = jnp.zeros(acc_sc.shape, dtype=acc_sc.dtype)

    def _scores():
        # (bq, bk) fp32 scores on the MXU; scale applied in fp32 for accuracy.
        s = jax.lax.dot_general(q_ref[0], k_ref[0], (((1,), (1,)), ((), ())),
                                preferred_element_type=jnp.float32)
        return s * sm_scale

    def _softmax_update(s):
        m_prev = m_sc[...]                     # (bq, 1)
        m_new = jnp.maximum(m_prev, jnp.max(s, axis=-1, keepdims=True))
        alpha = jnp.exp(m_prev - m_new)
        p = jnp.exp(s - m_new)
        l_sc[...] = alpha * l_sc[...] + jnp.sum(p, axis=-1, keepdims=True)
        acc_sc[...] = alpha * acc_sc[...] + jnp.dot(
            p.astype(v_ref.dtype), v_ref[0], preferred_element_type=jnp.float32)
        m_sc[...] = m_new

    # Fully-causal block: no mask needed (the common case below the diagonal).
    @pl.when(jnp.logical_and(in_range, jnp.logical_not(needs_mask)))
    def _unmasked():
        _softmax_update(_scores())

    # Block straddling the diagonal: apply the causal mask.
    @pl.when(jnp.logical_and(in_range, needs_mask))
    def _masked():
        s = _scores()
        row = q_start + jax.lax.broadcasted_iota(jnp.int32, (block_q, block_k), 0)
        col = k_start + jax.lax.broadcasted_iota(jnp.int32, (block_q, block_k), 1)
        s = jnp.where(col <= row, s, -1e30)
        _softmax_update(s)

    @pl.when(ki == last_k)                     # finalize at the last relevant kv block
    def _finalize():
        inv_l = pl.reciprocal(l_sc[...], approx=True)
        o_ref[0] = (acc_sc[...] * inv_l).astype(o_ref.dtype)


# ----------------------------- Pallas wrappers -----------------------------

def _pick_tile(dim, target, align):
    """Largest multiple of `align` <= target that divides dim; else the full dim."""
    if dim <= target:
        return dim
    t = (target // align) * align
    while t > align and dim % t != 0:
        t -= align
    return t if (t > 0 and dim % t == 0) else dim


def fused_linear(x, w, b, *, out_dtype, row_tile=256, col_tile=512):
    """y = x @ w + b, tiled (rows x cols), bf16 inputs, fp32 accumulation."""
    M, K = x.shape
    Kw, N = w.shape
    assert K == Kw
    rt = _pick_tile(M, row_tile, 8)
    ct = _pick_tile(N, col_tile, 128)
    grid = (M // rt, N // ct)
    return pl.pallas_call(
        _linear_bias_kernel,
        out_shape=jax.ShapeDtypeStruct((M, N), out_dtype),
        grid=grid,
        in_specs=[
            pl.BlockSpec((rt, K), lambda i, j: (i, 0)),
            pl.BlockSpec((K, ct), lambda i, j: (0, j)),
            pl.BlockSpec((1, ct), lambda i, j: (0, j)),
        ],
        out_specs=pl.BlockSpec((rt, ct), lambda i, j: (i, j)),
        compiler_params=pltpu.CompilerParams(
            dimension_semantics=("parallel", "parallel")),
    )(x, w, b)


def flash_causal_attention(q, k, v, *, block_q=128, block_k=128):
    """q, k, v: (B*H, T, D) bf16 -> (B*H, T, D) bf16, causal SDPA."""
    BH, T, D = q.shape
    bq = _pick_tile(T, block_q, 8)
    bk = _pick_tile(T, block_k, 8)
    grid = (BH, T // bq, T // bk)
    kernel = partial(_flash_attn_kernel,
                     sm_scale=1.0 / math.sqrt(D), block_q=bq, block_k=bk)
    return pl.pallas_call(
        kernel,
        out_shape=jax.ShapeDtypeStruct((BH, T, D), q.dtype),
        grid=grid,
        in_specs=[
            pl.BlockSpec((1, bq, D), lambda b, qi, ki: (b, qi, 0)),
            pl.BlockSpec((1, bk, D), lambda b, qi, ki: (b, ki, 0)),
            pl.BlockSpec((1, bk, D), lambda b, qi, ki: (b, ki, 0)),
        ],
        out_specs=pl.BlockSpec((1, bq, D), lambda b, qi, ki: (b, qi, 0)),
        scratch_shapes=[
            pltpu.VMEM((bq, 1), jnp.float32),   # running max m
            pltpu.VMEM((bq, 1), jnp.float32),   # running denom l
            pltpu.VMEM((bq, D), jnp.float32),   # running accumulator
        ],
        compiler_params=pltpu.CompilerParams(
            dimension_semantics=("parallel", "parallel", "arbitrary")),
    )(q, k, v)


def causal_self_attention(params, x, n_head, *, block_q=128, block_k=128):
    """Pallas forward of CausalSelfAttention (inference; LoRA merged as in eval())."""
    B, T, C = x.shape
    H = n_head
    assert C % H == 0
    D = C // H
    M = B * T

    xb = x.reshape(M, C).astype(jnp.bfloat16)

    # c_attn (LoRALinear, merged):  qkv = x @ (W^T + A @ B * scaling) + b
    qkv = fused_linear(xb, params["attn_w"], params["attn_b"], out_dtype=jnp.bfloat16)

    # Head split: (M, 3C) -> q, k, v each (B*H, T, D).  Single XLA transpose (glue).
    qkv = qkv.reshape(B, T, 3, H, D).transpose(2, 0, 3, 1, 4)      # (3, B, H, T, D)
    q = qkv[0].reshape(B * H, T, D)
    k = qkv[1].reshape(B * H, T, D)
    v = qkv[2].reshape(B * H, T, D)

    y = flash_causal_attention(q, k, v, block_q=block_q, block_k=block_k)

    y = y.reshape(B, H, T, D).transpose(0, 2, 1, 3).reshape(M, C).astype(jnp.bfloat16)

    # c_proj (LoRALinear, merged); resid_dropout(p=0) is identity.
    out = fused_linear(y, params["proj_w"], params["proj_b"], out_dtype=jnp.float32)
    return out.reshape(B, T, C)


# ----------------------------- parameters -----------------------------

def init_params(key, C, lora_rank, lora_alpha):
    r = lora_rank
    ks = jax.random.split(key, 8)

    def normal(k, shape, std=0.02):
        return (std * jax.random.normal(k, shape)).astype(jnp.float32)

    def kaiming(k, shape):
        bound = 1.0 / math.sqrt(shape[0])
        return jax.random.uniform(k, shape, minval=-bound, maxval=bound).astype(jnp.float32)

    # Weights stored transposed vs. PyTorch: (in_features, out_features).
    # NOTE: the PyTorch module zero-inits lora_B (LoRA is a no-op at fresh init);
    # we use small nonzero values so the LoRA branch actually contributes to the test.
    return {
        "attn_w": normal(ks[0], (C, 3 * C)),
        "attn_b": normal(ks[1], (1, 3 * C), std=0.01),
        "attn_A": kaiming(ks[2], (C, r)),
        "attn_B": normal(ks[3], (r, 3 * C)),
        "proj_w": normal(ks[4], (C, C)),
        "proj_b": normal(ks[5], (1, C), std=0.01),
        "proj_A": kaiming(ks[6], (C, r)),
        "proj_B": normal(ks[7], (r, C)),
        "scaling": lora_alpha / r,
    }


def merge_lora(raw):
    """W' = W + A @ B * scaling — exactly what LoRALinear.eval() merges.
    Merged weights are cast to bf16 for the MXU (fp32 accumulation in-kernel)."""
    s = raw["scaling"]
    return {
        "attn_w": (raw["attn_w"] + raw["attn_A"] @ raw["attn_B"] * s).astype(jnp.bfloat16),
        "attn_b": raw["attn_b"].astype(jnp.float32),
        "proj_w": (raw["proj_w"] + raw["proj_A"] @ raw["proj_B"] * s).astype(jnp.bfloat16),
        "proj_b": raw["proj_b"].astype(jnp.float32),
    }


# ----------------------------- pure-JAX reference -----------------------------

def ref_forward(raw, x, n_head):
    """fp32, un-merged LoRA, exact softmax — mirrors CausalSelfAttention.forward."""
    B, T, C = x.shape
    H = n_head
    D = C // H
    s = raw["scaling"]

    def lora_lin(h, w, b, a, bb):
        return h @ w + b + (h @ a) @ bb * s

    qkv = lora_lin(x.reshape(B * T, C), raw["attn_w"], raw["attn_b"],
                   raw["attn_A"], raw["attn_B"]).reshape(B, T, 3 * C)
    q, k, v = jnp.split(qkv, 3, axis=-1)
    q = q.reshape(B, T, H, D).transpose(0, 2, 1, 3)
    k = k.reshape(B, T, H, D).transpose(0, 2, 1, 3)
    v = v.reshape(B, T, H, D).transpose(0, 2, 1, 3)

    att = jnp.einsum("bhtd,bhsd->bhts", q, k) / math.sqrt(D)
    mask = jnp.tril(jnp.ones((T, T), bool))
    att = jnp.where(mask[None, None], att, -1e30)
    p = jax.nn.softmax(att, axis=-1)
    y = jnp.einsum("bhts,bhsd->bhtd", p, v)
    y = y.transpose(0, 2, 1, 3).reshape(B * T, C)
    y = lora_lin(y, raw["proj_w"], raw["proj_b"], raw["proj_A"], raw["proj_B"])
    return y.reshape(B, T, C)


# ----------------------------- main -----------------------------

if __name__ == "__main__":
    # Small, tile-friendly config consistent with the module (n_embd % n_head == 0).
    B, T = 2, 256
    C, H = 128, 4          # head_dim = 32
    lora_rank, lora_alpha = 4, 8.0

    key = jax.random.PRNGKey(0)
    pkey, xkey = jax.random.split(key)

    raw = init_params(pkey, C, lora_rank, lora_alpha)
    params = merge_lora(raw)

    x = jax.random.normal(xkey, (B, T, C), dtype=jnp.float32)

    out = causal_self_attention(params, x, H)
    out = jax.block_until_ready(out)

    ref = ref_forward(raw, x, H)
    assert out.shape == (B, T, C), out.shape
    max_err = float(jnp.max(jnp.abs(out - ref)))
    assert jnp.allclose(out, ref, atol=2e-2, rtol=2e-2), max_err

    print("KERNEL_OK")
</pallas_src>

<mosaic_0001>
module attributes {stable_mosaic.version = 11 : i64} {
  func.func @_linear_bias_kernel(%arg0: i32, %arg1: i32, %arg2: memref<256x128xbf16, #tpu.memory_space<vmem>>, %arg3: memref<128x384xbf16, #tpu.memory_space<vmem>>, %arg4: memref<1x384xf32, #tpu.memory_space<vmem>>, %arg5: memref<256x384xbf16, #tpu.memory_space<vmem>>) attributes {dimension_semantics = [#tpu.dimension_semantics<parallel>, #tpu.dimension_semantics<parallel>], iteration_bounds = array<i64: 2, 1>, scalar_prefetch = 0 : i64, scratch_operands = 0 : i64, tpu.core_type = #tpu.core_type<tc>, window_params = [{transform_indices = @transform_0, window_bounds = array<i64: 256, 128>}, {transform_indices = @transform_1, window_bounds = array<i64: 128, 384>}, {transform_indices = @transform_2, window_bounds = array<i64: 1, 384>}, {transform_indices = @transform_3, window_bounds = array<i64: 256, 384>}]} {
    %c0 = arith.constant 0 : index
    %c0_0 = arith.constant 0 : index
    %0 = vector.load %arg2[%c0, %c0_0] : memref<256x128xbf16, #tpu.memory_space<vmem>>, vector<256x128xbf16>
    %c0_1 = arith.constant 0 : index
    %c0_2 = arith.constant 0 : index
    %1 = vector.load %arg3[%c0_1, %c0_2] : memref<128x384xbf16, #tpu.memory_space<vmem>>, vector<128x384xbf16>
    %cst = arith.constant dense<0.000000e+00> : vector<256x384xf32>
    %2 = tpu.matmul %0, %1, %cst {dimension_numbers = #tpu.dot_dimension_numbers<[1], [0], [0], [1], [0, 0, 1, 1], [], []>} : vector<256x128xbf16>, vector<128x384xbf16>, vector<256x384xf32> -> vector<256x384xf32>
    %c0_3 = arith.constant 0 : index
    %c0_4 = arith.constant 0 : index
    %3 = vector.load %arg4[%c0_3, %c0_4] : memref<1x384xf32, #tpu.memory_space<vmem>>, vector<1x384xf32>
    %4 = vector.broadcast %3 : vector<1x384xf32> to vector<256x384xf32>
    %5 = arith.addf %2, %4 : vector<256x384xf32>
    %6 = arith.truncf %5 : vector<256x384xf32> to vector<256x384xbf16>
    %c0_5 = arith.constant 0 : index
    %c0_6 = arith.constant 0 : index
    %7 = vector.load %arg5[%c0_5, %c0_6] : memref<256x384xbf16, #tpu.memory_space<vmem>>, vector<256x384xbf16>
    tpu.vector_store %arg5[%c0_5, %c0_6], %6 {strides = array<i32>} : memref<256x384xbf16, #tpu.memory_space<vmem>>, vector<256x384xbf16>,
    return
  }
  func.func @transform_0(%arg0: i32, %arg1: i32) -> (i32, i32) {
    %c0_i32 = arith.constant 0 : i32
    %c0_i32_0 = arith.constant 0 : i32
    return %arg0, %c0_i32 : i32, i32
  }
  func.func @transform_1(%arg0: i32, %arg1: i32) -> (i32, i32) {
    %c0_i32 = arith.constant 0 : i32
    %c0_i32_0 = arith.constant 0 : i32
    return %c0_i32, %arg1 : i32, i32
  }
  func.func @transform_2(%arg0: i32, %arg1: i32) -> (i32, i32) {
    %c0_i32 = arith.constant 0 : i32
    %c0_i32_0 = arith.constant 0 : i32
    return %c0_i32, %arg1 : i32, i32
  }
  func.func @transform_3(%arg0: i32, %arg1: i32) -> (i32, i32) {
    %c0_i32 = arith.constant 0 : i32
    return %arg0, %arg1 : i32, i32
  }
}

</mosaic_0001>

<llo_original>
// kernel: tpu_custom_call.1
$region0: #{tpu_custom_call.1}
  #allocation0 [shape = 'u32[]', space=smem, size = 0x4, offset = 0x4, fixed_abs, tag = 'smem constant byte address 0x4 - core index']
  #allocation1 [shape = 'u32[144,128]{1,0:T(1,128)}', space=vmem, size = 0x12000, scoped, tag = 'internal scratch']
  %s0 = inlined_call_operand.hbm [shape: bf16[512,128], index: 0, kind: input, shape index: {}]
  %s1 = inlined_call_operand.hbm [shape: bf16[128,384], index: 1, kind: input, shape index: {}]
  %s2 = inlined_call_operand.vmem [shape: f32[1,384], index: 2, kind: input, shape index: {}]
  %s3 = inlined_call_operand.hbm [shape: bf16[512,384], index: 3, kind: output, shape index: {}]
  %s4 = sld [smem:[#allocation0]]
  $region53: #{tpu_custom_call.1} parent=0
    _
  %s6 = ssub.s32 1, %s4
  %s7 = scalar_select 0, %s6, %s4
  $region1: #{tpu_custom_call.1} parent=0
    #allocation2 [shape = 'u8[131072]{0}', space=vmem, size = 0x20000, scoped, tag = 'input window, operand 0']
    #allocation3 [shape = 's32[2]{0}', space=sflag, size = 0x8, scoped, tag = 'scoped memory for tpu_custom_call.1']
    #allocation4 [shape = 's32[2]{0}', space=sflag, size = 0x8, scoped, tag = 'scoped memory for tpu_custom_call.1']
    #allocation5 [shape = 'u8[98304]{0}', space=vmem, size = 0x18000, scoped, tag = 'input window, operand 1, single buffered']
    #allocation6 [shape = 's32[1]{0}', space=sflag, size = 0x4, scoped, tag = 'scoped memory for tpu_custom_call.1']
    #allocation7 [shape = 'u8[393216]{0}', space=vmem, size = 0x60000, scoped, tag = 'output window, operand 0']
    %8 = vsyncpa [#allocation3], 0
    %s9 = scalar_lea.sflag [#allocation3], 1
    %10 = vsyncpa %s9, 0
    %11 = vsyncpa [#allocation6], 0
    %12 = vsyncpa [#allocation4], 0
    %s13 = scalar_lea.sflag [#allocation4], 1
    %14 = vsyncpa %s13, 0
    loop: start=0, step=1, limit=4
    $region2: #{tpu_custom_call.1} parent=1 // loop_pre_header
      _
    $region3: #{tpu_custom_call.1} parent=1 // loop_header
      %s16 = sphi 0, %s20
      %p17 = scmp.ge.s32.totalorder %s16, 4
      %s23 = sphi 0, %s35
      %s24 = sphi 0, %s31
      %s25 = sphi 0, %s23
      %s26 = sphi 0, %s24
      %s27 = sphi 0, %s25
      %s28 = sphi 0, %s26
      %s38 = sphi 0, %s40
      %s41 = sphi 0, %s38
      %s42 = sphi 0, %s41
      %s58 = sphi 0, %s42
      %s64 = sphi 0, %s66
      %s67 = sphi 0, %s64
      %s68 = sphi 0, %s67
      %s84 = sphi 0, %s68
      %s90 = sphi 0, %s92
      %s93 = sphi 0, %s90
      %s94 = sphi 0, %s93
      %s110 = sphi 0, %s94
      %s118 = sphi 0, %s120
      %s121 = sphi 0, %s118
      %s122 = sphi 0, %s121
      %s138 = sphi 0, %s122
    $region4: #{tpu_custom_call.1} parent=1 // loop_header_branch
      %19 = sbr.rel (%p17) target = $region8
    $region5: #{tpu_custom_call.1} parent=1 // loop_body
      %s21 = ssub.s32 %s16, 1
      %s22 = ssub.s32 %s16, 2
      %s29 = sadd.s32 1, %s24
      %p30 = scmp.ge.s32.totalorder %s29, 1
      %s31 = scalar_select %p30, 0, %s29
      %s32 = sadd.s32 1, %s23
      %s33 = scalar_select %p30, %s32, %s23
      %p34 = scmp.ge.s32.totalorder %s33, 2
      %s35 = scalar_select %p34, 0, %s33
      %s36 = ssub.s32 %s23, %s35
      %p37 = scmp.eq.s32.totalorder %s36, 0
      %s39 = sadd.s32 %s38, 1
      %s40 = scalar_select %p37, %s38, %s39
      %p43 = pneg %p37
      %p44 = scmp.eq.s32.totalorder %s16, 1
      %p45 = por %p43, %p44
      %p46 = scmp.ne.s32.totalorder %s38, %s41
      %p47 = scmp.eq.s32.totalorder %s16, 0
      %p48 = por %p46, %p47
      %p49 = scmp.ne.s32.totalorder %s38, %s41
      %p50 = scmp.eq.s32.totalorder %s21, 1
      %p51 = por %p49, %p50
      %p52 = scmp.ne.s32.totalorder %s41, %s42
      %p53 = scmp.eq.s32.totalorder %s21, 0
      %p54 = por %p52, %p53
      %p55 = scmp.ne.s32.totalorder %s41, %s42
      %p56 = scmp.eq.s32.totalorder %s22, 1
      %p57 = por %p55, %p56
      %p59 = scmp.ne.s32.totalorder %s42, %s58
      %p60 = scmp.eq.s32.totalorder %s22, 0
      %p61 = por %p59, %p60
      %s62 = ssub.s32 %s24, %s31
      %p63 = scmp.eq.s32.totalorder %s62, 0
      %s65 = sadd.s32 %s64, 1
      %s66 = scalar_select %p63, %s64, %s65
      %p69 = pneg %p63
      %p70 = scmp.eq.s32.totalorder %s16, 1
      %p71 = por %p69, %p70
      %p72 = scmp.ne.s32.totalorder %s64, %s67
      %p73 = scmp.eq.s32.totalorder %s16, 0
      %p74 = por %p72, %p73
      %p75 = scmp.ne.s32.totalorder %s64, %s67
      %p76 = scmp.eq.s32.totalorder %s21, 1
      %p77 = por %p75, %p76
      %p78 = scmp.ne.s32.totalorder %s67, %s68
      %p79 = scmp.eq.s32.totalorder %s21, 0
      %p80 = por %p78, %p79
      %p81 = scmp.ne.s32.totalorder %s67, %s68
      %p82 = scmp.eq.s32.totalorder %s22, 1
      %p83 = por %p81, %p82
      %p85 = scmp.ne.s32.totalorder %s68, %s84
      %p86 = scmp.eq.s32.totalorder %s22, 0
      %p87 = por %p85, %p86
      %s88 = ssub.s32 %s24, %s31
      %p89 = scmp.eq.s32.totalorder %s88, 0
      %s91 = sadd.s32 %s90, 1
      %s92 = scalar_select %p89, %s90, %s91
      %p95 = pneg %p89
      %p96 = scmp.eq.s32.totalorder %s16, 1
      %p97 = por %p95, %p96
      %p98 = scmp.ne.s32.totalorder %s90, %s93
      %p99 = scmp.eq.s32.totalorder %s16, 0
      %p100 = por %p98, %p99
      %p101 = scmp.ne.s32.totalorder %s90, %s93
      %p102 = scmp.eq.s32.totalorder %s21, 1
      %p103 = por %p101, %p102
      %p104 = scmp.ne.s32.totalorder %s93, %s94
      %p105 = scmp.eq.s32.totalorder %s21, 0
      %p106 = por %p104, %p105
      %p107 = scmp.ne.s32.totalorder %s93, %s94
      %p108 = scmp.eq.s32.totalorder %s22, 1
      %p109 = por %p107, %p108
      %p111 = scmp.ne.s32.totalorder %s94, %s110
      %p112 = scmp.eq.s32.totalorder %s22, 0
      %p113 = por %p111, %p112
      %s114 = ssub.s32 %s23, %s35
      %s115 = ssub.s32 %s24, %s31
      %s116 = sor.u32 %s114, %s115
      %p117 = scmp.eq.s32.totalorder %s116, 0
      %s119 = sadd.s32 %s118, 1
      %s120 = scalar_select %p117, %s118, %s119
      %p123 = pneg %p117
      %p124 = scmp.eq.s32.totalorder %s16, 1
      %p125 = por %p123, %p124
      %p126 = scmp.ne.s32.totalorder %s118, %s121
      %p127 = scmp.eq.s32.totalorder %s16, 0
      %p128 = por %p126, %p127
      %p129 = scmp.ne.s32.totalorder %s118, %s121
      %p130 = scmp.eq.s32.totalorder %s21, 1
      %p131 = por %p129, %p130
      %p132 = scmp.ne.s32.totalorder %s121, %s122
      %p133 = scmp.eq.s32.totalorder %s21, 0
      %p134 = por %p132, %p133
      %p135 = scmp.ne.s32.totalorder %s121, %s122
      %p136 = scmp.eq.s32.totalorder %s22, 1
      %p137 = por %p135, %p136
      %p139 = scmp.ne.s32.totalorder %s122, %s138
      %p140 = scmp.eq.s32.totalorder %s22, 0
      %p141 = por %p139, %p140
      %p142 = scmp.le.s32.totalorder 1, %s16
      %p143 = scmp.lt.s32.totalorder %s16, 3
      %p144 = pnand %p142, %p143
      %p145 = pneg %p144
      // Predicated region
      $region9: #{tpu_custom_call.1} parent=5 // pred_check
        _
      $region10: #{tpu_custom_call.1} parent=5 // pred_check_branch
        %147 = sbr.rel (%p144) target = $region12
      $region11: #{tpu_custom_call.1} parent=5 // pred_region
        %s148 = ssub.s32 %s16, 1
        // Predicated region
        $region13: #{tpu_custom_call.1} parent=11 // pred_check
          %p149 = pneg %p80
        $region14: #{tpu_custom_call.1} parent=11 // pred_check_branch
          %151 = sbr.rel (%p149) target = $region16
        $region15: #{tpu_custom_call.1} parent=11 // pred_region
          %s152 = smul.u32 3, %s26
          %s154 = ssub.s32 3072, 3072
          %155 = vsyncadd [#allocation6], %s154
          %s156 = smul.addr %s152, 64
          %s157 = scalar_lea.hbm %s1, %s156
          %s158 = sshll.u32 [#allocation5], 4
          %s159 = int_to_ptr.vmem [resolvable:$true] %s158
          %164 = dma.hbm_to_vmem [thread:$0]  %s157, 3072, %s159, [#allocation6], 192, 192, 12
        $region16: #{tpu_custom_call.1} parent=11 // pred_fallthru
          _
        // Predicated region
        $region17: #{tpu_custom_call.1} parent=11 // pred_check
          %p165 = pneg %p106
        $region18: #{tpu_custom_call.1} parent=11 // pred_check_branch
          %167 = sbr.rel (%p165) target = $region20
        $region19: #{tpu_custom_call.1} parent=11 // pred_region
          %s168 = smul.u32 3, %s26
          %p169 = scmp.lt.s32.totalorder %s168, 2
          %s170 = scalar_select %p169, %s168, 2
          %s171 = scalar_lea.vmem %s2, %s170
          %s172 = smul.u32 3, %s26
        $region20: #{tpu_custom_call.1} parent=11 // pred_fallthru
          _
      $region12: #{tpu_custom_call.1} parent=5 // pred_fallthru
        _
      %p173 = scmp.lt.s32.totalorder %s16, 2
      // Predicated region
      $region21: #{tpu_custom_call.1} parent=5 // pred_check
        %p174 = pneg %p173
      $region22: #{tpu_custom_call.1} parent=5 // pred_check_branch
        %176 = sbr.rel (%p174) target = $region24
      $region23: #{tpu_custom_call.1} parent=5 // pred_region
        // Predicated region
        $region25: #{tpu_custom_call.1} parent=23 // pred_check
          %p177 = pneg %p48
        $region26: #{tpu_custom_call.1} parent=23 // pred_check_branch
          %179 = sbr.rel (%p177) target = $region28
        $region27: #{tpu_custom_call.1} parent=23 // pred_region
          %s180 = sand.u32 %s38, 1
          %s181 = scalar_lea.sflag [#allocation3], %s180
          %s182 = sand.u32 %s38, 1
          %s183 = smul.addr %s182, 128
          %s184 = scalar_lea.vmem [#allocation2], %s183
          %s185 = smul.u32 32, %s23
          %s187 = ssub.s32 2048, 2048
          %188 = vsyncadd %s181, %s187
          %s189 = smul.addr %s185, 64
          %s190 = scalar_lea.hbm %s0, %s189
          %s191 = sshll.u32 %s184, 4
          %s192 = int_to_ptr.vmem [resolvable:$true] %s191
          %197 = dma.hbm_to_vmem [thread:$0]  %s190, 2048, %s192, %s181, 64, 64, 4
        $region28: #{tpu_custom_call.1} parent=23 // pred_fallthru
          _
      $region24: #{tpu_custom_call.1} parent=5 // pred_fallthru
        _
      %p198 = scmp.le.s32.totalorder 1, %s16
      %p199 = scmp.lt.s32.totalorder %s16, 3
      %p200 = pnand %p198, %p199
      %p201 = pneg %p200
      // Predicated region
      $region29: #{tpu_custom_call.1} parent=5 // pred_check
        _
      $region30: #{tpu_custom_call.1} parent=5 // pred_check_branch
        %203 = sbr.rel (%p200) target = $region32
      $region31: #{tpu_custom_call.1} parent=5 // pred_region
        %s204 = ssub.s32 %s16, 1
        %s205 = sand.u32 %s41, 1
        %s206 = scalar_lea.sflag [#allocation3], %s205
        %s207 = sand.u32 %s41, 1
        %s208 = smul.addr %s207, 128
        %s209 = scalar_lea.vmem [#allocation2], %s208
        // Predicated region
        $region33: #{tpu_custom_call.1} parent=31 // pred_check
          %p210 = pneg %p54
        $region34: #{tpu_custom_call.1} parent=31 // pred_check_branch
          %212 = sbr.rel (%p210) target = $region36
        $region35: #{tpu_custom_call.1} parent=31 // pred_region
          %213 = dma.done %s206, 2048
        $region36: #{tpu_custom_call.1} parent=31 // pred_fallthru
          _
        // Predicated region
        $region37: #{tpu_custom_call.1} parent=31 // pred_check
          %p214 = pneg %p80
        $region38: #{tpu_custom_call.1} parent=31 // pred_check_branch
          %216 = sbr.rel (%p214) target = $region40
        $region39: #{tpu_custom_call.1} parent=31 // pred_region
          %217 = dma.done [#allocation6], 3072
        $region40: #{tpu_custom_call.1} parent=31 // pred_fallthru
          _
        %s218 = sand.u32 %s41, 1
        %s219 = scalar_lea.sflag [#allocation3], %s218
        %s220 = sand.u32 %s41, 1
        %s221 = smul.addr %s220, 128
        %s222 = scalar_lea.vmem [#allocation2], %s221
        %p223 = pneg %p54
        %p224 = pneg %p51
        %p225 = pneg %p80
        %p226 = pneg %p77
        %s227 = smul.u32 3, %s26
        %p228 = scmp.lt.s32.totalorder %s227, 2
        %s229 = scalar_select %p228, %s227, 2
        %s230 = scalar_lea.vmem %s2, %s229
        %p231 = pneg %p106
        %p232 = pneg %p103
        %p233 = pneg %p134
        %p234 = pneg %p131
        %s235 = sand.u32 %s121, 1
        %s236 = scalar_lea.sflag [#allocation4], %s235
        %s237 = sand.u32 %s121, 1
        %s238 = smul.addr %s237, 384
        %s239 = scalar_lea.vmem [#allocation7], %s238
        %s240 = smul.u32 32, %s25
        %s241 = smul.u32 3, %s26
        %s242 = smul.u32 3, %s26
        %p243 = scmp.lt.s32.totalorder %s242, 2
        %s244 = scalar_select %p243, %s242, 2
        %s245 = scalar_lea.vmem %s2, %s244
        %s246 = smul.u32 3, %s26
        %s247 = smul.u32 32, %s25
        %s248 = smul.u32 3, %s26
        %v250 = vld [vmem:[%s209] sm:$0xf]
        %v251 = vld [vmem:[%s209 + $0x4] sm:$0xf]
        %v252 = vld [vmem:[%s209 + $0x8] sm:$0xf]
        %v253 = vld [vmem:[%s209 + $0xc] sm:$0xf]
        %v254 = vld [vmem:[%s209 + $0x10] sm:$0xf]
        %v255 = vld [vmem:[%s209 + $0x14] sm:$0xf]
        %v256 = vld [vmem:[%s209 + $0x18] sm:$0xf]
        %v257 = vld [vmem:[%s209 + $0x1c] sm:$0xf]
        %v258 = vld [vmem:[%s209 + $0x20] sm:$0xf]
        %v259 = vld [vmem:[%s209 + $0x24] sm:$0xf]
        %v260 = vld [vmem:[%s209 + $0x28] sm:$0xf]
        %v261 = vld [vmem:[%s209 + $0x2c] sm:$0xf]
        %v262 = vld [vmem:[%s209 + $0x30] sm:$0xf]
        %v263 = vld [vmem:[%s209 + $0x34] sm:$0xf]
        %v264 = vld [vmem:[%s209 + $0x38] sm:$0xf]
        %v265 = vld [vmem:[%s209 + $0x3c] sm:$0xf]
        %v266 = vld [vmem:[%s209 + $0x40] sm:$0xf]
        %v267 = vld [vmem:[%s209 + $0x44] sm:$0xf]
        %v268 = vld [vmem:[%s209 + $0x48] sm:$0xf]
        %v269 = vld [vmem:[%s209 + $0x4c] sm:$0xf]
        %v270 = vld [vmem:[%s209 + $0x50] sm:$0xf]
        %v271 = vld [vmem:[%s209 + $0x54] sm:$0xf]
        %v272 = vld [vmem:[%s209 + $0x58] sm:$0xf]
        %v273 = vld [vmem:[%s209 + $0x5c] sm:$0xf]
        %v274 = vld [vmem:[%s209 + $0x60] sm:$0xf]
        %v275 = vld [vmem:[%s209 + $0x64] sm:$0xf]
        %v276 = vld [vmem:[%s209 + $0x68] sm:$0xf]
        %v277 = vld [vmem:[%s209 + $0x6c] sm:$0xf]
        %v278 = vld [vmem:[%s209 + $0x70] sm:$0xf]
        %v279 = vld [vmem:[%s209 + $0x74] sm:$0xf]
        %v280 = vld [vmem:[%s209 + $0x78] sm:$0xf]
        %v281 = vld [vmem:[%s209 + $0x7c] sm:$0xf]
        %v282 = vld [vmem:[#allocation5] sm:$0xff]
        %v283 = vld [vmem:[#allocation5 + $0x8] sm:$0xf]
        %v284 = vld [vmem:[#allocation5 + $0xc] sm:$0xff]
        %v285 = vld [vmem:[#allocation5 + $0x14] sm:$0xf]
        %v286 = vld [vmem:[#allocation5 + $0x18] sm:$0xff]
        %v287 = vld [vmem:[#allocation5 + $0x20] sm:$0xf]
        %v288 = vld [vmem:[#allocation5 + $0x24] sm:$0xff]
        %v289 = vld [vmem:[#allocation5 + $0x2c] sm:$0xf]
        %v290 = vld [vmem:[#allocation5 + $0x30] sm:$0xff]
        %v291 = vld [vmem:[#allocation5 + $0x38] sm:$0xf]
        %v292 = vld [vmem:[#allocation5 + $0x3c] sm:$0xff]
        %v293 = vld [vmem:[#allocation5 + $0x44] sm:$0xf]
        %v294 = vld [vmem:[#allocation5 + $0x48] sm:$0xff]
        %v295 = vld [vmem:[#allocation5 + $0x50] sm:$0xf]
        %v296 = vld [vmem:[#allocation5 + $0x54] sm:$0xff]
        %v297 = vld [vmem:[#allocation5 + $0x5c] sm:$0xf]
        %v298 = vld [vmem:[#allocation5 + $0x60] sm:$0xff]
        %v299 = vld [vmem:[#allocation5 + $0x68] sm:$0xf]
        %v300 = vld [vmem:[#allocation5 + $0x6c] sm:$0xff]
        %v301 = vld [vmem:[#allocation5 + $0x74] sm:$0xf]
        %v302 = vld [vmem:[#allocation5 + $0x78] sm:$0xff]
        %v303 = vld [vmem:[#allocation5 + $0x80] sm:$0xf]
        %v304 = vld [vmem:[#allocation5 + $0x84] sm:$0xff]
        %v305 = vld [vmem:[#allocation5 + $0x8c] sm:$0xf]
        %v306 = vld [vmem:[#allocation5 + $0x90] sm:$0xff]
        %v307 = vld [vmem:[#allocation5 + $0x98] sm:$0xf]
        %v308 = vld [vmem:[#allocation5 + $0x9c] sm:$0xff]
        %v309 = vld [vmem:[#allocation5 + $0xa4] sm:$0xf]
        %v310 = vld [vmem:[#allocation5 + $0xa8] sm:$0xff]
        %v311 = vld [vmem:[#allocation5 + $0xb0] sm:$0xf]
        %v312 = vld [vmem:[#allocation5 + $0xb4] sm:$0xff]
        %v313 = vld [vmem:[#allocation5 + $0xbc] sm:$0xf]
        %v314 = vld [vmem:[%s245] sm:$0x7]
        %v316 = vlaneseq
        %v317 = vshrl.u32 %v316, 7
        %v318 = vsub.s32 0, %v317
        %v319 = vrot.slane %v314, %v318
        %v320 = vlaneseq
        %v321 = vshrl.u32 %v320, 7
        %v322 = vsub.s32 1, %v321
        %v323 = vrot.slane %v314, %v322
        %v324 = vlaneseq
        %v325 = vshrl.u32 %v324, 7
        %v326 = vsub.s32 2, %v325
        %v327 = vrot.slane %v314, %v326
        %v363 = vunpack.c.l.b16 %v250
        %v364 = vunpack.c.l.b16 %v251
        %v365 = vunpack.c.l.b16 %v252
        %v366 = vunpack.c.l.b16 %v253
        %v367 = vunpack.c.l.b16 %v254
        %v368 = vunpack.c.l.b16 %v255
        %v369 = vunpack.c.l.b16 %v256
        %v370 = vunpack.c.l.b16 %v257
        %v371 = vunpack.c.l.b16 %v258
        %v372 = vunpack.c.l.b16 %v259
        %v373 = vunpack.c.l.b16 %v260
        %v374 = vunpack.c.l.b16 %v261
        %v375 = vunpack.c.l.b16 %v262
        %v376 = vunpack.c.l.b16 %v263
        %v377 = vunpack.c.l.b16 %v264
        %v378 = vunpack.c.l.b16 %v265
        %v379 = vunpack.c.l.b16 %v266
        %v380 = vunpack.c.l.b16 %v267
        %v381 = vunpack.c.l.b16 %v268
        %v382 = vunpack.c.l.b16 %v269
        %v383 = vunpack.c.l.b16 %v270
        %v384 = vunpack.c.l.b16 %v271
        %v385 = vunpack.c.l.b16 %v272
        %v386 = vunpack.c.l.b16 %v273
        %v387 = vunpack.c.l.b16 %v274
        %v388 = vunpack.c.l.b16 %v275
        %v389 = vunpack.c.l.b16 %v276
        %v390 = vunpack.c.l.b16 %v277
        %v391 = vunpack.c.l.b16 %v278
        %v392 = vunpack.c.l.b16 %v279
        %v393 = vunpack.c.l.b16 %v280
        %v394 = vunpack.c.l.b16 %v281
        %v395 = vpack.c.b16 %v364, %v363
        %v396 = vpack.c.b16 %v366, %v365
        %v397 = vpack.c.b16 %v368, %v367
        %v398 = vpack.c.b16 %v370, %v369
        %v399 = vpack.c.b16 %v372, %v371
        %v400 = vpack.c.b16 %v374, %v373
        %v401 = vpack.c.b16 %v376, %v375
        %v402 = vpack.c.b16 %v378, %v377
        %v403 = vpack.c.b16 %v380, %v379
        %v404 = vpack.c.b16 %v382, %v381
        %v405 = vpack.c.b16 %v384, %v383
        %v406 = vpack.c.b16 %v386, %v385
        %v407 = vpack.c.b16 %v388, %v387
        %v408 = vpack.c.b16 %v390, %v389
        %v409 = vpack.c.b16 %v392, %v391
        %v410 = vpack.c.b16 %v394, %v393
        %v459 = vunpack.c.l.b16 %v282
        %v460 = vunpack.c.h.b16 %v282
        %v461 = vunpack.c.l.b16 %v283
        %v462 = vunpack.c.l.b16 %v284
        %v463 = vunpack.c.h.b16 %v284
        %v464 = vunpack.c.l.b16 %v285
        %v465 = vunpack.c.l.b16 %v286
        %v466 = vunpack.c.h.b16 %v286
        %v467 = vunpack.c.l.b16 %v287
        %v468 = vunpack.c.l.b16 %v288
        %v469 = vunpack.c.h.b16 %v288
        %v470 = vunpack.c.l.b16 %v289
        %v471 = vunpack.c.l.b16 %v290
        %v472 = vunpack.c.h.b16 %v290
        %v473 = vunpack.c.l.b16 %v291
        %v474 = vunpack.c.l.b16 %v292
        %v475 = vunpack.c.h.b16 %v292
        %v476 = vunpack.c.l.b16 %v293
        %v477 = vunpack.c.l.b16 %v294
        %v478 = vunpack.c.h.b16 %v294
        %v479 = vunpack.c.l.b16 %v295
        %v480 = vunpack.c.l.b16 %v296
        %v481 = vunpack.c.h.b16 %v296
        %v482 = vunpack.c.l.b16 %v297
        %v483 = vunpack.c.l.b16 %v298
        %v484 = vunpack.c.h.b16 %v298
        %v485 = vunpack.c.l.b16 %v299
        %v486 = vunpack.c.l.b16 %v300
        %v487 = vunpack.c.h.b16 %v300
        %v488 = vunpack.c.l.b16 %v301
        %v489 = vunpack.c.l.b16 %v302
        %v490 = vunpack.c.h.b16 %v302
        %v491 = vunpack.c.l.b16 %v303
        %v492 = vunpack.c.l.b16 %v304
        %v493 = vunpack.c.h.b16 %v304
        %v494 = vunpack.c.l.b16 %v305
        %v495 = vunpack.c.l.b16 %v306
        %v496 = vunpack.c.h.b16 %v306
        %v497 = vunpack.c.l.b16 %v307
        %v498 = vunpack.c.l.b16 %v308
        %v499 = vunpack.c.h.b16 %v308
        %v500 = vunpack.c.l.b16 %v309
        %v501 = vunpack.c.l.b16 %v310
        %v502 = vunpack.c.h.b16 %v310
        %v503 = vunpack.c.l.b16 %v311
        %v504 = vunpack.c.l.b16 %v312
        %v505 = vunpack.c.h.b16 %v312
        %v506 = vunpack.c.l.b16 %v313
        %v507 = vpack.c.b16 %v462, %v459
        %v508 = vpack.c.b16 %v463, %v460
        %v509 = vpack.c.b16 %v464, %v461
        %v510 = vpack.c.b16 %v468, %v465
        %v511 = vpack.c.b16 %v469, %v466
        %v512 = vpack.c.b16 %v470, %v467
        %v513 = vpack.c.b16 %v474, %v471
        %v514 = vpack.c.b16 %v475, %v472
        %v515 = vpack.c.b16 %v476, %v473
        %v516 = vpack.c.b16 %v480, %v477
        %v517 = vpack.c.b16 %v481, %v478
        %v518 = vpack.c.b16 %v482, %v479
        %v519 = vpack.c.b16 %v486, %v483
        %v520 = vpack.c.b16 %v487, %v484
        %v521 = vpack.c.b16 %v488, %v485
        %v522 = vpack.c.b16 %v492, %v489
        %v523 = vpack.c.b16 %v493, %v490
        %v524 = vpack.c.b16 %v494, %v491
        %v525 = vpack.c.b16 %v498, %v495
        %v526 = vpack.c.b16 %v499, %v496
        %v527 = vpack.c.b16 %v500, %v497
        %v528 = vpack.c.b16 %v504, %v501
        %v529 = vpack.c.b16 %v505, %v502
        %v530 = vpack.c.b16 %v506, %v503
        %555 = vmatprep.subr.bf16.mxu0 %v508
        %556 = vmatpush1.bf16.msra.mxu0 %v507
        %557 = vmatprep.subr.bf16.mxu0 %v511
        %558 = vmatpush1.bf16.msra.mxu0 %v510
        %559 = vmatprep.subr.bf16.mxu0 %v514
        %560 = vmatpush1.bf16.msra.mxu0 %v513
        %561 = vmatprep.subr.bf16.mxu0 %v517
        %562 = vmatpush1.bf16.msra.mxu0 %v516
        %563 = vmatprep.subr.bf16.mxu0 %v520
        %564 = vmatpush1.bf16.msra.mxu0 %v519
        %565 = vmatprep.subr.bf16.mxu0 %v523
        %566 = vmatpush1.bf16.msra.mxu0 %v522
        %567 = vmatprep.subr.bf16.mxu0 %v526
        %568 = vmatpush1.bf16.msra.mxu0 %v525
        %569 = vmatprep.subr.bf16.mxu0 %v529
        %570 = vmatpush1.bf16.msra.mxu0 %v528
        %571 = vmatprep.subr.bf16.mxu0 0
        %572 = vmatpush1.bf16.msra.mxu0 0
        %573 = vmatprep.subr.bf16.mxu0 0
        %574 = vmatpush1.bf16.msra.mxu0 0
        %575 = vmatprep.subr.bf16.mxu0 0
        %576 = vmatpush1.bf16.msra.mxu0 0
        %577 = vmatprep.subr.bf16.mxu0 0
        %578 = vmatpush1.bf16.msra.mxu0 0
        %579 = vmatprep.subr.bf16.mxu0 0
        %580 = vmatpush1.bf16.msra.mxu0 0
        %581 = vmatprep.subr.bf16.mxu0 0
        %582 = vmatpush1.bf16.msra.mxu0 0
        %583 = vmatprep.subr.bf16.mxu0 0
        %584 = vmatpush1.bf16.msra.mxu0 0
        %585 = vmatprep.subr.bf16.mxu0 0
        %586 = vmatpush1.bf16.msra.mxu0 0
        %587 = vmatprep.mubr.bf16.mxu0 0
        %588 = vmatmul.mubr.bf16.gmra.mrb[0].mxu0 %v395
        %v589 = vpop.f32.mrb[0].mxu0
        %v590 = vadd.f32 %v319, %v589
        %v591 = vpop.f32.mrb[0].mxu0
        %v592 = vadd.f32 %v323, %v591
        %v593 = vpop.f32.mrb[0].mxu0
        %v594 = vadd.f32 %v319, %v593
        %v595 = vpop.f32.mrb[0].mxu0
        %v596 = vadd.f32 %v323, %v595
        %597 = vmatprep.mubr.bf16.mxu0 0
        %598 = vmatmul.mubr.bf16.gmra.mrb[0].mxu0 %v396
        %v599 = vpop.f32.mrb[0].mxu0
        %v600 = vadd.f32 %v319, %v599
        %v601 = vpop.f32.mrb[0].mxu0
        %v602 = vadd.f32 %v323, %v601
        %v603 = vpop.f32.mrb[0].mxu0
        %v604 = vadd.f32 %v319, %v603
        %v605 = vpop.f32.mrb[0].mxu0
        %v606 = vadd.f32 %v323, %v605
        %607 = vmatprep.mubr.bf16.mxu0 0
        %608 = vmatmul.mubr.bf16.gmra.mrb[0].mxu0 %v397
        %v609 = vpop.f32.mrb[0].mxu0
        %v610 = vadd.f32 %v319, %v609
        %v611 = vpop.f32.mrb[0].mxu0
        %v612 = vadd.f32 %v323, %v611
        %v613 = vpop.f32.mrb[0].mxu0
        %v614 = vadd.f32 %v319, %v613
        %v615 = vpop.f32.mrb[0].mxu0
        %v616 = vadd.f32 %v323, %v615
        %617 = vmatprep.mubr.bf16.mxu0 0
        %618 = vmatmul.mubr.bf16.gmra.mrb[0].mxu0 %v398
        %v619 = vpop.f32.mrb[0].mxu0
        %v620 = vadd.f32 %v319, %v619
        %v621 = vpop.f32.mrb[0].mxu0
        %v622 = vadd.f32 %v323, %v621
        %v623 = vpop.f32.mrb[0].mxu0
        %v624 = vadd.f32 %v319, %v623
        %v625 = vpop.f32.mrb[0].mxu0
        %v626 = vadd.f32 %v323, %v625
        %627 = vmatprep.mubr.bf16.mxu0 0
        %628 = vmatmul.mubr.bf16.gmra.mrb[0].mxu0 %v399
        %v629 = vpop.f32.mrb[0].mxu0
        %v630 = vadd.f32 %v319, %v629
        %v631 = vpop.f32.mrb[0].mxu0
        %v632 = vadd.f32 %v323, %v631
        %v633 = vpop.f32.mrb[0].mxu0
        %v634 = vadd.f32 %v319, %v633
        %v635 = vpop.f32.mrb[0].mxu0
        %v636 = vadd.f32 %v323, %v635
        %637 = vmatprep.mubr.bf16.mxu0 0
        %638 = vmatmul.mubr.bf16.gmra.mrb[0].mxu0 %v400
        %v639 = vpop.f32.mrb[0].mxu0
        %v640 = vadd.f32 %v319, %v639
        %v641 = vpop.f32.mrb[0].mxu0
        %v642 = vadd.f32 %v323, %v641
        %v643 = vpop.f32.mrb[0].mxu0
        %v644 = vadd.f32 %v319, %v643
        %v645 = vpop.f32.mrb[0].mxu0
        %v646 = vadd.f32 %v323, %v645
        %647 = vmatprep.mubr.bf16.mxu0 0
        %648 = vmatmul.mubr.bf16.gmra.mrb[0].mxu0 %v401
        %v649 = vpop.f32.mrb[0].mxu0
        %v650 = vadd.f32 %v319, %v649
        %v651 = vpop.f32.mrb[0].mxu0
        %v652 = vadd.f32 %v323, %v651
        %v653 = vpop.f32.mrb[0].mxu0
        %v654 = vadd.f32 %v319, %v653
        %v655 = vpop.f32.mrb[0].mxu0
        %v656 = vadd.f32 %v323, %v655
        %657 = vmatprep.mubr.bf16.mxu0 0
        %658 = vmatmul.mubr.bf16.gmra.mrb[0].mxu0 %v402
        %v659 = vpop.f32.mrb[0].mxu0
        %v660 = vadd.f32 %v319, %v659
        %v661 = vpop.f32.mrb[0].mxu0
        %v662 = vadd.f32 %v323, %v661
        %v663 = vpop.f32.mrb[0].mxu0
        %v664 = vadd.f32 %v319, %v663
        %v665 = vpop.f32.mrb[0].mxu0
        %v666 = vadd.f32 %v323, %v665
        %667 = vmatprep.mubr.bf16.mxu0 0
        %668 = vmatmul.mubr.bf16.gmra.mrb[0].mxu0 %v403
        %v669 = vpop.f32.mrb[0].mxu0
        %v670 = vadd.f32 %v319, %v669
        %v671 = vpop.f32.mrb[0].mxu0
        %v672 = vadd.f32 %v323, %v671
        %v673 = vpop.f32.mrb[0].mxu0
        %v674 = vadd.f32 %v319, %v673
        %v675 = vpop.f32.mrb[0].mxu0
        %v676 = vadd.f32 %v323, %v675
        %677 = vmatprep.mubr.bf16.mxu0 0
        %678 = vmatmul.mubr.bf16.gmra.mrb[0].mxu0 %v404
        %v679 = vpop.f32.mrb[0].mxu0
        %v680 = vadd.f32 %v319, %v679
        %v681 = vpop.f32.mrb[0].mxu0
        %v682 = vadd.f32 %v323, %v681
        %v683 = vpop.f32.mrb[0].mxu0
        %v684 = vadd.f32 %v319, %v683
        %v685 = vpop.f32.mrb[0].mxu0
        %v686 = vadd.f32 %v323, %v685
        %687 = vmatprep.mubr.bf16.mxu0 0
        %688 = vmatmul.mubr.bf16.gmra.mrb[0].mxu0 %v405
        %v689 = vpop.f32.mrb[0].mxu0
        %v690 = vadd.f32 %v319, %v689
        %v691 = vpop.f32.mrb[0].mxu0
        %v692 = vadd.f32 %v323, %v691
        %v693 = vpop.f32.mrb[0].mxu0
        %v694 = vadd.f32 %v319, %v693
        %v695 = vpop.f32.mrb[0].mxu0
        %v696 = vadd.f32 %v323, %v695
        %697 = vmatprep.mubr.bf16.mxu0 0
        %698 = vmatmul.mubr.bf16.gmra.mrb[0].mxu0 %v406
        %v699 = vpop.f32.mrb[0].mxu0
        %v700 = vadd.f32 %v319, %v699
        %v701 = vpop.f32.mrb[0].mxu0
        %v702 = vadd.f32 %v323, %v701
        %v703 = vpop.f32.mrb[0].mxu0
        %v704 = vadd.f32 %v319, %v703
        %v705 = vpop.f32.mrb[0].mxu0
        %v706 = vadd.f32 %v323, %v705
        %707 = vmatprep.mubr.bf16.mxu0 0
        %708 = vmatmul.mubr.bf16.gmra.mrb[0].mxu0 %v407
        %v709 = vpop.f32.mrb[0].mxu0
        %v710 = vadd.f32 %v319, %v709
        %v711 = vpop.f32.mrb[0].mxu0
        %v712 = vadd.f32 %v323, %v711
        %v713 = vpop.f32.mrb[0].mxu0
        %v714 = vadd.f32 %v319, %v713
        %v715 = vpop.f32.mrb[0].mxu0
        %v716 = vadd.f32 %v323, %v715
        %717 = vmatprep.mubr.bf16.mxu0 0
        %718 = vmatmul.mubr.bf16.gmra.mrb[0].mxu0 %v408
        %v719 = vpop.f32.mrb[0].mxu0
        %v720 = vadd.f32 %v319, %v719
        %v721 = vpop.f32.mrb[0].mxu0
        %v722 = vadd.f32 %v323, %v721
        %v723 = vpop.f32.mrb[0].mxu0
        %v724 = vadd.f32 %v319, %v723
        %v725 = vpop.f32.mrb[0].mxu0
        %v726 = vadd.f32 %v323, %v725
        %727 = vmatprep.mubr.bf16.mxu0 0
        %728 = vmatmul.mubr.bf16.gmra.mrb[0].mxu0 %v409
        %v729 = vpop.f32.mrb[0].mxu0
        %v730 = vadd.f32 %v319, %v729
        %v731 = vpop.f32.mrb[0].mxu0
        %v732 = vadd.f32 %v323, %v731
        %v733 = vpop.f32.mrb[0].mxu0
        %v734 = vadd.f32 %v319, %v733
        %v735 = vpop.f32.mrb[0].mxu0
        %v736 = vadd.f32 %v323, %v735
        %737 = vmatprep.mubr.bf16.mxu0 0
        %738 = vmatmul.mubr.bf16.gmra.mrb[0].mxu0 %v410
        %v739 = vpop.f32.mrb[0].mxu0
        %v740 = vadd.f32 %v319, %v739
        %v741 = vpop.f32.mrb[0].mxu0
        %v742 = vadd.f32 %v323, %v741
        %v743 = vpop.f32.mrb[0].mxu0
        %v744 = vadd.f32 %v319, %v743
        %v745 = vpop.f32.mrb[0].mxu0
        %v746 = vadd.f32 %v323, %v745
        %747 = vdwg.mxu0
        %748 = vmatprep.subr.bf16.mxu0 0
        %749 = vmatpush1.bf16.msra.mxu0 %v509
        %750 = vmatprep.subr.bf16.mxu0 0
        %751 = vmatpush1.bf16.msra.mxu0 %v512
        %752 = vmatprep.subr.bf16.mxu0 0
        %753 = vmatpush1.bf16.msra.mxu0 %v515
        %754 = vmatprep.subr.bf16.mxu0 0
        %755 = vmatpush1.bf16.msra.mxu0 %v518
        %756 = vmatprep.subr.bf16.mxu0 0
        %757 = vmatpush1.bf16.msra.mxu0 %v521
        %758 = vmatprep.subr.bf16.mxu0 0
        %759 = vmatpush1.bf16.msra.mxu0 %v524
        %760 = vmatprep.subr.bf16.mxu0 0
        %761 = vmatpush1.bf16.msra.mxu0 %v527
        %762 = vmatprep.subr.bf16.mxu0 0
        %763 = vmatpush1.bf16.msra.mxu0 %v530
        %764 = vmatprep.subr.bf16.mxu0 0
        %765 = vmatpush1.bf16.msra.mxu0 0
        %766 = vmatprep.subr.bf16.mxu0 0
        %767 = vmatpush1.bf16.msra.mxu0 0
        %768 = vmatprep.subr.bf16.mxu0 0
        %769 = vmatpush1.bf16.msra.mxu0 0
        %770 = vmatprep.subr.bf16.mxu0 0
        %771 = vmatpush1.bf16.msra.mxu0 0
        %772 = vmatprep.subr.bf16.mxu0 0
        %773 = vmatpush1.bf16.msra.mxu0 0
        %774 = vmatprep.subr.bf16.mxu0 0
        %775 = vmatpush1.bf16.msra.mxu0 0
        %776 = vmatprep.subr.bf16.mxu0 0
        %777 = vmatpush1.bf16.msra.mxu0 0
        %778 = vmatprep.subr.bf16.mxu0 0
        %779 = vmatpush1.bf16.msra.mxu0 0
        %780 = vmatprep.mubr.bf16.mxu0 0
        %781 = vmatmul.mubr.bf16.gmra.mrb[0].mxu0 %v395
        %v782 = vpop.f32.mrb[0].mxu0
        %v783 = vadd.f32 %v327, %v782
        %v784 = vpop.f32.mrb[0].mxu0
        %v785 = vpop.f32.mrb[0].mxu0
        %v786 = vadd.f32 %v327, %v785
        %v787 = vpop.f32.mrb[0].mxu0
        %788 = vmatprep.mubr.bf16.mxu0 0
        %789 = vmatmul.mubr.bf16.gmra.mrb[0].mxu0 %v396
        %v790 = vpop.f32.mrb[0].mxu0
        %v791 = vadd.f32 %v327, %v790
        %v792 = vpop.f32.mrb[0].mxu0
        %v793 = vpop.f32.mrb[0].mxu0
        %v794 = vadd.f32 %v327, %v793
        %v795 = vpop.f32.mrb[0].mxu0
        %796 = vmatprep.mubr.bf16.mxu0 0
        %797 = vmatmul.mubr.bf16.gmra.mrb[0].mxu0 %v397
        %v798 = vpop.f32.mrb[0].mxu0
        %v799 = vadd.f32 %v327, %v798
        %v800 = vpop.f32.mrb[0].mxu0
        %v801 = vpop.f32.mrb[0].mxu0
        %v802 = vadd.f32 %v327, %v801
        %v803 = vpop.f32.mrb[0].mxu0
        %804 = vmatprep.mubr.bf16.mxu0 0
        %805 = vmatmul.mubr.bf16.gmra.mrb[0].mxu0 %v398
        %v806 = vpop.f32.mrb[0].mxu0
        %v807 = vadd.f32 %v327, %v806
        %v808 = vpop.f32.mrb[0].mxu0
        %v809 = vpop.f32.mrb[0].mxu0
        %v810 = vadd.f32 %v327, %v809
        %v811 = vpop.f32.mrb[0].mxu0
        %812 = vmatprep.mubr.bf16.mxu0 0
        %813 = vmatmul.mubr.bf16.gmra.mrb[0].mxu0 %v399
        %v814 = vpop.f32.mrb[0].mxu0
        %v815 = vadd.f32 %v327, %v814
        %v816 = vpop.f32.mrb[0].mxu0
        %v817 = vpop.f32.mrb[0].mxu0
        %v818 = vadd.f32 %v327, %v817
        %v819 = vpop.f32.mrb[0].mxu0
        %820 = vmatprep.mubr.bf16.mxu0 0
        %821 = vmatmul.mubr.bf16.gmra.mrb[0].mxu0 %v400
        %v822 = vpop.f32.mrb[0].mxu0
        %v823 = vadd.f32 %v327, %v822
        %v824 = vpop.f32.mrb[0].mxu0
        %v825 = vpop.f32.mrb[0].mxu0
        %v826 = vadd.f32 %v327, %v825
        %v827 = vpop.f32.mrb[0].mxu0
        %828 = vmatprep.mubr.bf16.mxu0 0
        %829 = vmatmul.mubr.bf16.gmra.mrb[0].mxu0 %v401
        %v830 = vpop.f32.mrb[0].mxu0
        %v831 = vadd.f32 %v327, %v830
        %v832 = vpop.f32.mrb[0].mxu0
        %v833 = vpop.f32.mrb[0].mxu0
        %v834 = vadd.f32 %v327, %v833
        %v835 = vpop.f32.mrb[0].mxu0
        %836 = vmatprep.mubr.bf16.mxu0 0
        %837 = vmatmul.mubr.bf16.gmra.mrb[0].mxu0 %v402
        %v838 = vpop.f32.mrb[0].mxu0
        %v839 = vadd.f32 %v327, %v838
        %v840 = vpop.f32.mrb[0].mxu0
        %v841 = vpop.f32.mrb[0].mxu0
        %v842 = vadd.f32 %v327, %v841
        %v843 = vpop.f32.mrb[0].mxu0
        %844 = vmatprep.mubr.bf16.mxu0 0
        %845 = vmatmul.mubr.bf16.gmra.mrb[0].mxu0 %v403
        %v846 = vpop.f32.mrb[0].mxu0
        %v847 = vadd.f32 %v327, %v846
        %v848 = vpop.f32.mrb[0].mxu0
        %v849 = vpop.f32.mrb[0].mxu0
        %v850 = vadd.f32 %v327, %v849
        %v851 = vpop.f32.mrb[0].mxu0
        %852 = vmatprep.mubr.bf16.mxu0 0
        %853 = vmatmul.mubr.bf16.gmra.mrb[0].mxu0 %v404
        %v854 = vpop.f32.mrb[0].mxu0
        %v855 = vadd.f32 %v327, %v854
        %v856 = vpop.f32.mrb[0].mxu0
        %v857 = vpop.f32.mrb[0].mxu0
        %v858 = vadd.f32 %v327, %v857
        %v859 = vpop.f32.mrb[0].mxu0
        %860 = vmatprep.mubr.bf16.mxu0 0
        %861 = vmatmul.mubr.bf16.gmra.mrb[0].mxu0 %v405
        %v862 = vpop.f32.mrb[0].mxu0
        %v863 = vadd.f32 %v327, %v862
        %v864 = vpop.f32.mrb[0].mxu0
        %v865 = vpop.f32.mrb[0].mxu0
        %v866 = vadd.f32 %v327, %v865
        %v867 = vpop.f32.mrb[0].mxu0
        %868 = vmatprep.mubr.bf16.mxu0 0
        %869 = vmatmul.mubr.bf16.gmra.mrb[0].mxu0 %v406
        %v870 = vpop.f32.mrb[0].mxu0
        %v871 = vadd.f32 %v327, %v870
        %v872 = vpop.f32.mrb[0].mxu0
        %v873 = vpop.f32.mrb[0].mxu0
        %v874 = vadd.f32 %v327, %v873
        %v875 = vpop.f32.mrb[0].mxu0
        %876 = vmatprep.mubr.bf16.mxu0 0
        %877 = vmatmul.mubr.bf16.gmra.mrb[0].mxu0 %v407
        %v878 = vpop.f32.mrb[0].mxu0
        %v879 = vadd.f32 %v327, %v878
        %v880 = vpop.f32.mrb[0].mxu0
        %v881 = vpop.f32.mrb[0].mxu0
        %v882 = vadd.f32 %v327, %v881
        %v883 = vpop.f32.mrb[0].mxu0
        %884 = vmatprep.mubr.bf16.mxu0 0
        %885 = vmatmul.mubr.bf16.gmra.mrb[0].mxu0 %v408
        %v886 = vpop.f32.mrb[0].mxu0
        %v887 = vadd.f32 %v327, %v886
        %v888 = vpop.f32.mrb[0].mxu0
        %v889 = vpop.f32.mrb[0].mxu0
        %v890 = vadd.f32 %v327, %v889
        %v891 = vpop.f32.mrb[0].mxu0
        %892 = vmatprep.mubr.bf16.mxu0 0
        %893 = vmatmul.mubr.bf16.gmra.mrb[0].mxu0 %v409
        %v894 = vpop.f32.mrb[0].mxu0
        %v895 = vadd.f32 %v327, %v894
        %v896 = vpop.f32.mrb[0].mxu0
        %v897 = vpop.f32.mrb[0].mxu0
        %v898 = vadd.f32 %v327, %v897
        %v899 = vpop.f32.mrb[0].mxu0
        %900 = vmatprep.mubr.bf16.mxu0 0
        %901 = vmatmul.mubr.bf16.gmra.mrb[0].mxu0 %v410
        %v902 = vpop.f32.mrb[0].mxu0
        %v903 = vadd.f32 %v327, %v902
        %v904 = vpop.f32.mrb[0].mxu0
        %v905 = vpop.f32.mrb[0].mxu0
        %v906 = vadd.f32 %v327, %v905
        %v907 = vpop.f32.mrb[0].mxu0
        %908 = vdwg.mxu0
        %v909 = vpack.c.bf16 %v594, %v590
        %v910 = vpack.c.bf16 %v596, %v592
        %v911 = vpack.c.bf16 %v786, %v783
        %v912 = vpack.c.bf16 %v604, %v600
        %v913 = vpack.c.bf16 %v606, %v602
        %v914 = vpack.c.bf16 %v794, %v791
        %v915 = vpack.c.bf16 %v614, %v610
        %v916 = vpack.c.bf16 %v616, %v612
        %v917 = vpack.c.bf16 %v802, %v799
        %v918 = vpack.c.bf16 %v624, %v620
        %v919 = vpack.c.bf16 %v626, %v622
        %v920 = vpack.c.bf16 %v810, %v807
        %v921 = vpack.c.bf16 %v634, %v630
        %v922 = vpack.c.bf16 %v636, %v632
        %v923 = vpack.c.bf16 %v818, %v815
        %v924 = vpack.c.bf16 %v644, %v640
        %v925 = vpack.c.bf16 %v646, %v642
        %v926 = vpack.c.bf16 %v826, %v823
        %v927 = vpack.c.bf16 %v654, %v650
        %v928 = vpack.c.bf16 %v656, %v652
        %v929 = vpack.c.bf16 %v834, %v831
        %v930 = vpack.c.bf16 %v664, %v660
        %v931 = vpack.c.bf16 %v666, %v662
        %v932 = vpack.c.bf16 %v842, %v839
        %v933 = vpack.c.bf16 %v674, %v670
        %v934 = vpack.c.bf16 %v676, %v672
        %v935 = vpack.c.bf16 %v850, %v847
        %v936 = vpack.c.bf16 %v684, %v680
        %v937 = vpack.c.bf16 %v686, %v682
        %v938 = vpack.c.bf16 %v858, %v855
        %v939 = vpack.c.bf16 %v694, %v690
        %v940 = vpack.c.bf16 %v696, %v692
        %v941 = vpack.c.bf16 %v866, %v863
        %v942 = vpack.c.bf16 %v704, %v700
        %v943 = vpack.c.bf16 %v706, %v702
        %v944 = vpack.c.bf16 %v874, %v871
        %v945 = vpack.c.bf16 %v714, %v710
        %v946 = vpack.c.bf16 %v716, %v712
        %v947 = vpack.c.bf16 %v882, %v879
        %v948 = vpack.c.bf16 %v724, %v720
        %v949 = vpack.c.bf16 %v726, %v722
        %v950 = vpack.c.bf16 %v890, %v887
        %v951 = vpack.c.bf16 %v734, %v730
        %v952 = vpack.c.bf16 %v736, %v732
        %v953 = vpack.c.bf16 %v898, %v895
        %v954 = vpack.c.bf16 %v744, %v740
        %v955 = vpack.c.bf16 %v746, %v742
        %v956 = vpack.c.bf16 %v906, %v903
        %v1005 = vunpack.c.l.b16 %v909
        %v1006 = vunpack.c.l.b16 %v910
        %v1007 = vunpack.c.l.b16 %v911
        %v1008 = vunpack.c.h.b16 %v909
        %v1009 = vunpack.c.h.b16 %v910
        %v1010 = vunpack.c.h.b16 %v911
        %v1011 = vunpack.c.l.b16 %v912
        %v1012 = vunpack.c.l.b16 %v913
        %v1013 = vunpack.c.l.b16 %v914
        %v1014 = vunpack.c.h.b16 %v912
        %v1015 = vunpack.c.h.b16 %v913
        %v1016 = vunpack.c.h.b16 %v914
        %v1017 = vunpack.c.l.b16 %v915
        %v1018 = vunpack.c.l.b16 %v916
        %v1019 = vunpack.c.l.b16 %v917
        %v1020 = vunpack.c.h.b16 %v915
        %v1021 = vunpack.c.h.b16 %v916
        %v1022 = vunpack.c.h.b16 %v917
        %v1023 = vunpack.c.l.b16 %v918
        %v1024 = vunpack.c.l.b16 %v919
        %v1025 = vunpack.c.l.b16 %v920
        %v1026 = vunpack.c.h.b16 %v918
        %v1027 = vunpack.c.h.b16 %v919
        %v1028 = vunpack.c.h.b16 %v920
        %v1029 = vunpack.c.l.b16 %v921
        %v1030 = vunpack.c.l.b16 %v922
        %v1031 = vunpack.c.l.b16 %v923
        %v1032 = vunpack.c.h.b16 %v921
        %v1033 = vunpack.c.h.b16 %v922
        %v1034 = vunpack.c.h.b16 %v923
        %v1035 = vunpack.c.l.b16 %v924
        %v1036 = vunpack.c.l.b16 %v925
        %v1037 = vunpack.c.l.b16 %v926
        %v1038 = vunpack.c.h.b16 %v924
        %v1039 = vunpack.c.h.b16 %v925
        %v1040 = vunpack.c.h.b16 %v926
        %v1041 = vunpack.c.l.b16 %v927
        %v1042 = vunpack.c.l.b16 %v928
        %v1043 = vunpack.c.l.b16 %v929
        %v1044 = vunpack.c.h.b16 %v927
        %v1045 = vunpack.c.h.b16 %v928
        %v1046 = vunpack.c.h.b16 %v929
        %v1047 = vunpack.c.l.b16 %v930
        %v1048 = vunpack.c.l.b16 %v931
        %v1049 = vunpack.c.l.b16 %v932
        %v1050 = vunpack.c.h.b16 %v930
        %v1051 = vunpack.c.h.b16 %v931
        %v1052 = vunpack.c.h.b16 %v932
        %v1053 = vunpack.c.l.b16 %v933
        %v1054 = vunpack.c.l.b16 %v934
        %v1055 = vunpack.c.l.b16 %v935
        %v1056 = vunpack.c.h.b16 %v933
        %v1057 = vunpack.c.h.b16 %v934
        %v1058 = vunpack.c.h.b16 %v935
        %v1059 = vunpack.c.l.b16 %v936
        %v1060 = vunpack.c.l.b16 %v937
        %v1061 = vunpack.c.l.b16 %v938
        %v1062 = vunpack.c.h.b16 %v936
        %v1063 = vunpack.c.h.b16 %v937
        %v1064 = vunpack.c.h.b16 %v938
        %v1065 = vunpack.c.l.b16 %v939
        %v1066 = vunpack.c.l.b16 %v940
        %v1067 = vunpack.c.l.b16 %v941
        %v1068 = vunpack.c.h.b16 %v939
        %v1069 = vunpack.c.h.b16 %v940
        %v1070 = vunpack.c.h.b16 %v941
        %v1071 = vunpack.c.l.b16 %v942
        %v1072 = vunpack.c.l.b16 %v943
        %v1073 = vunpack.c.l.b16 %v944
        %v1074 = vunpack.c.h.b16 %v942
        %v1075 = vunpack.c.h.b16 %v943
        %v1076 = vunpack.c.h.b16 %v944
        %v1077 = vunpack.c.l.b16 %v945
        %v1078 = vunpack.c.l.b16 %v946
        %v1079 = vunpack.c.l.b16 %v947
        %v1080 = vunpack.c.h.b16 %v945
        %v1081 = vunpack.c.h.b16 %v946
        %v1082 = vunpack.c.h.b16 %v947
        %v1083 = vunpack.c.l.b16 %v948
        %v1084 = vunpack.c.l.b16 %v949
        %v1085 = vunpack.c.l.b16 %v950
        %v1086 = vunpack.c.h.b16 %v948
        %v1087 = vunpack.c.h.b16 %v949
        %v1088 = vunpack.c.h.b16 %v950
        %v1089 = vunpack.c.l.b16 %v951
        %v1090 = vunpack.c.l.b16 %v952
        %v1091 = vunpack.c.l.b16 %v953
        %v1092 = vunpack.c.h.b16 %v951
        %v1093 = vunpack.c.h.b16 %v952
        %v1094 = vunpack.c.h.b16 %v953
        %v1095 = vunpack.c.l.b16 %v954
        %v1096 = vunpack.c.l.b16 %v955
        %v1097 = vunpack.c.l.b16 %v956
        %v1098 = vunpack.c.h.b16 %v954
        %v1099 = vunpack.c.h.b16 %v955
        %v1100 = vunpack.c.h.b16 %v956
        %v1101 = vpack.c.b16 %v1006, %v1005
        %v1102 = vpack.c.b16 %v1007, %v1007
        %v1103 = vpack.c.b16 %v1009, %v1008
        %v1104 = vpack.c.b16 %v1010, %v1010
        %v1105 = vpack.c.b16 %v1012, %v1011
        %v1106 = vpack.c.b16 %v1013, %v1013
        %v1107 = vpack.c.b16 %v1015, %v1014
        %v1108 = vpack.c.b16 %v1016, %v1016
        %v1109 = vpack.c.b16 %v1018, %v1017
        %v1110 = vpack.c.b16 %v1019, %v1019
        %v1111 = vpack.c.b16 %v1021, %v1020
        %v1112 = vpack.c.b16 %v1022, %v1022
        %v1113 = vpack.c.b16 %v1024, %v1023
        %v1114 = vpack.c.b16 %v1025, %v1025
        %v1115 = vpack.c.b16 %v1027, %v1026
        %v1116 = vpack.c.b16 %v1028, %v1028
        %v1117 = vpack.c.b16 %v1030, %v1029
        %v1118 = vpack.c.b16 %v1031, %v1031
        %v1119 = vpack.c.b16 %v1033, %v1032
        %v1120 = vpack.c.b16 %v1034, %v1034
        %v1121 = vpack.c.b16 %v1036, %v1035
        %v1122 = vpack.c.b16 %v1037, %v1037
        %v1123 = vpack.c.b16 %v1039, %v1038
        %v1124 = vpack.c.b16 %v1040, %v1040
        %v1125 = vpack.c.b16 %v1042, %v1041
        %v1126 = vpack.c.b16 %v1043, %v1043
        %v1127 = vpack.c.b16 %v1045, %v1044
        %v1128 = vpack.c.b16 %v1046, %v1046
        %v1129 = vpack.c.b16 %v1048, %v1047
        %v1130 = vpack.c.b16 %v1049, %v1049
        %v1131 = vpack.c.b16 %v1051, %v1050
        %v1132 = vpack.c.b16 %v1052, %v1052
        %v1133 = vpack.c.b16 %v1054, %v1053
        %v1134 = vpack.c.b16 %v1055, %v1055
        %v1135 = vpack.c.b16 %v1057, %v1056
        %v1136 = vpack.c.b16 %v1058, %v1058
        %v1137 = vpack.c.b16 %v1060, %v1059
        %v1138 = vpack.c.b16 %v1061, %v1061
        %v1139 = vpack.c.b16 %v1063, %v1062
        %v1140 = vpack.c.b16 %v1064, %v1064
        %v1141 = vpack.c.b16 %v1066, %v1065
        %v1142 = vpack.c.b16 %v1067, %v1067
        %v1143 = vpack.c.b16 %v1069, %v1068
        %v1144 = vpack.c.b16 %v1070, %v1070
        %v1145 = vpack.c.b16 %v1072, %v1071
        %v1146 = vpack.c.b16 %v1073, %v1073
        %v1147 = vpack.c.b16 %v1075, %v1074
        %v1148 = vpack.c.b16 %v1076, %v1076
        %v1149 = vpack.c.b16 %v1078, %v1077
        %v1150 = vpack.c.b16 %v1079, %v1079
        %v1151 = vpack.c.b16 %v1081, %v1080
        %v1152 = vpack.c.b16 %v1082, %v1082
        %v1153 = vpack.c.b16 %v1084, %v1083
        %v1154 = vpack.c.b16 %v1085, %v1085
        %v1155 = vpack.c.b16 %v1087, %v1086
        %v1156 = vpack.c.b16 %v1088, %v1088
        %v1157 = vpack.c.b16 %v1090, %v1089
        %v1158 = vpack.c.b16 %v1091, %v1091
        %v1159 = vpack.c.b16 %v1093, %v1092
        %v1160 = vpack.c.b16 %v1094, %v1094
        %v1161 = vpack.c.b16 %v1096, %v1095
        %v1162 = vpack.c.b16 %v1097, %v1097
        %v1163 = vpack.c.b16 %v1099, %v1098
        %v1164 = vpack.c.b16 %v1100, %v1100
        %1229 = vst [vmem:[%s239] sm:$0xff] %v1101
        %1230 = vst [vmem:[%s239 + $0x8] sm:$0xf] %v1102
        %1231 = vst [vmem:[%s239 + $0xc] sm:$0xff] %v1103
        %1232 = vst [vmem:[%s239 + $0x14] sm:$0xf] %v1104
        %1233 = vst [vmem:[%s239 + $0x18] sm:$0xff] %v1105
        %1234 = vst [vmem:[%s239 + $0x20] sm:$0xf] %v1106
        %1235 = vst [vmem:[%s239 + $0x24] sm:$0xff] %v1107
        %1236 = vst [vmem:[%s239 + $0x2c] sm:$0xf] %v1108
        %1237 = vst [vmem:[%s239 + $0x30] sm:$0xff] %v1109
        %1238 = vst [vmem:[%s239 + $0x38] sm:$0xf] %v1110
        %1239 = vst [vmem:[%s239 + $0x3c] sm:$0xff] %v1111
        %1240 = vst [vmem:[%s239 + $0x44] sm:$0xf] %v1112
        %1241 = vst [vmem:[%s239 + $0x48] sm:$0xff] %v1113
        %1242 = vst [vmem:[%s239 + $0x50] sm:$0xf] %v1114
        %1243 = vst [vmem:[%s239 + $0x54] sm:$0xff] %v1115
        %1244 = vst [vmem:[%s239 + $0x5c] sm:$0xf] %v1116
        %1245 = vst [vmem:[%s239 + $0x60] sm:$0xff] %v1117
        %1246 = vst [vmem:[%s239 + $0x68] sm:$0xf] %v1118
        %1247 = vst [vmem:[%s239 + $0x6c] sm:$0xff] %v1119
        %1248 = vst [vmem:[%s239 + $0x74] sm:$0xf] %v1120
        %1249 = vst [vmem:[%s239 + $0x78] sm:$0xff] %v1121
        %1250 = vst [vmem:[%s239 + $0x80] sm:$0xf] %v1122
        %1251 = vst [vmem:[%s239 + $0x84] sm:$0xff] %v1123
        %1252 = vst [vmem:[%s239 + $0x8c] sm:$0xf] %v1124
        %1253 = vst [vmem:[%s239 + $0x90] sm:$0xff] %v1125
        %1254 = vst [vmem:[%s239 + $0x98] sm:$0xf] %v1126
        %1255 = vst [vmem:[%s239 + $0x9c] sm:$0xff] %v1127
        %1256 = vst [vmem:[%s239 + $0xa4] sm:$0xf] %v1128
        %1257 = vst [vmem:[%s239 + $0xa8] sm:$0xff] %v1129
        %1258 = vst [vmem:[%s239 + $0xb0] sm:$0xf] %v1130
        %1259 = vst [vmem:[%s239 + $0xb4] sm:$0xff] %v1131
        %1260 = vst [vmem:[%s239 + $0xbc] sm:$0xf] %v1132
        %1261 = vst [vmem:[%s239 + $0xc0] sm:$0xff] %v1133
        %1262 = vst [vmem:[%s239 + $0xc8] sm:$0xf] %v1134
        %1263 = vst [vmem:[%s239 + $0xcc] sm:$0xff] %v1135
        %1264 = vst [vmem:[%s239 + $0xd4] sm:$0xf] %v1136
        %1265 = vst [vmem:[%s239 + $0xd8] sm:$0xff] %v1137
        %1266 = vst [vmem:[%s239 + $0xe0] sm:$0xf] %v1138
        %1267 = vst [vmem:[%s239 + $0xe4] sm:$0xff] %v1139
        %1268 = vst [vmem:[%s239 + $0xec] sm:$0xf] %v1140
        %1269 = vst [vmem:[%s239 + $0xf0] sm:$0xff] %v1141
        %1270 = vst [vmem:[%s239 + $0xf8] sm:$0xf] %v1142
        %1271 = vst [vmem:[%s239 + $0xfc] sm:$0xff] %v1143
        %1272 = vst [vmem:[%s239 + $0x104] sm:$0xf] %v1144
        %1273 = vst [vmem:[%s239 + $0x108] sm:$0xff] %v1145
        %1274 = vst [vmem:[%s239 + $0x110] sm:$0xf] %v1146
        %1275 = vst [vmem:[%s239 + $0x114] sm:$0xff] %v1147
        %1276 = vst [vmem:[%s239 + $0x11c] sm:$0xf] %v1148
        %1277 = vst [vmem:[%s239 + $0x120] sm:$0xff] %v1149
        %1278 = vst [vmem:[%s239 + $0x128] sm:$0xf] %v1150
        %1279 = vst [vmem:[%s239 + $0x12c] sm:$0xff] %v1151
        %1280 = vst [vmem:[%s239 + $0x134] sm:$0xf] %v1152
        %1281 = vst [vmem:[%s239 + $0x138] sm:$0xff] %v1153
        %1282 = vst [vmem:[%s239 + $0x140] sm:$0xf] %v1154
        %1283 = vst [vmem:[%s239 + $0x144] sm:$0xff] %v1155
        %1284 = vst [vmem:[%s239 + $0x14c] sm:$0xf] %v1156
        %1285 = vst [vmem:[%s239 + $0x150] sm:$0xff] %v1157
        %1286 = vst [vmem:[%s239 + $0x158] sm:$0xf] %v1158
        %1287 = vst [vmem:[%s239 + $0x15c] sm:$0xff] %v1159
        %1288 = vst [vmem:[%s239 + $0x164] sm:$0xf] %v1160
        %1289 = vst [vmem:[%s239 + $0x168] sm:$0xff] %v1161
        %1290 = vst [vmem:[%s239 + $0x170] sm:$0xf] %v1162
        %1291 = vst [vmem:[%s239 + $0x174] sm:$0xff] %v1163
        %1292 = vst [vmem:[%s239 + $0x17c] sm:$0xf] %v1164
        %s1293 = sand.u32 %s121, 1
        %s1294 = scalar_lea.sflag [#allocation4], %s1293
        %s1295 = sand.u32 %s121, 1
        %s1296 = smul.addr %s1295, 384
        %s1297 = scalar_lea.vmem [#allocation7], %s1296
        // Predicated region
        $region41: #{tpu_custom_call.1} parent=31 // pred_check
          %p1298 = pneg %p131
        $region42: #{tpu_custom_call.1} parent=31 // pred_check_branch
          %1300 = sbr.rel (%p1298) target = $region44
        $region43: #{tpu_custom_call.1} parent=31 // pred_region
          %s1301 = smul.u32 32, %s25
          %s1302 = smul.u32 3, %s26
          %s1304 = ssub.s32 6144, 6144
          %1305 = vsyncadd %s1294, %s1304
          %s1306 = smul.addr %s1301, 3
          %s1307 = sadd.s32 %s1302, %s1306
          %s1308 = smul.addr %s1307, 64
          %s1309 = scalar_lea.hbm %s3, %s1308
          %s1310 = sshll.u32 %s1297, 4
          %s1311 = int_to_ptr.vmem [resolvable:$true] %s1310
          %1316 = dma.vmem_to_hbm [thread:$0]  %s1311, 6144, %s1309, %s1294, 192, 192, 12
        $region44: #{tpu_custom_call.1} parent=31 // pred_fallthru
          _
      $region32: #{tpu_custom_call.1} parent=5 // pred_fallthru
        _
      %p1317 = scmp.le.s32.totalorder 2, %s16
      // Predicated region
      $region45: #{tpu_custom_call.1} parent=5 // pred_check
        %p1318 = pneg %p1317
      $region46: #{tpu_custom_call.1} parent=5 // pred_check_branch
        %1320 = sbr.rel (%p1318) target = $region48
      $region47: #{tpu_custom_call.1} parent=5 // pred_region
        %s1321 = ssub.s32 %s16, 2
        // Predicated region
        $region49: #{tpu_custom_call.1} parent=47 // pred_check
          %p1322 = pneg %p137
        $region50: #{tpu_custom_call.1} parent=47 // pred_check_branch
          %1324 = sbr.rel (%p1322) target = $region52
        $region51: #{tpu_custom_call.1} parent=47 // pred_region
          %s1325 = sand.u32 %s122, 1
          %s1326 = scalar_lea.sflag [#allocation4], %s1325
          %s1327 = sand.u32 %s122, 1
          %s1328 = smul.addr %s1327, 384
          %s1329 = scalar_lea.vmem [#allocation7], %s1328
          %1330 = dma.done %s1326, 6144
        $region52: #{tpu_custom_call.1} parent=47 // pred_fallthru
          _
      $region48: #{tpu_custom_call.1} parent=5 // pred_fallthru
        _
    $region6: #{tpu_custom_call.1} parent=1 // loop_footer
      %s20 = sadd.s32 1, %s16
    $region7: #{tpu_custom_call.1} parent=1 // loop_footer_branch
      %15 = sbr.rel target = $region3
    $region8: #{tpu_custom_call.1} parent=1 // loop_exit
      _
    %1331 = vsyncpa [#allocation3], 1
    %s1332 = scalar_lea.sflag [#allocation3], 1
    %1333 = vsyncpa %s1332, 1
    %1334 = vsyncpa [#allocation6], 1
    %1335 = vsyncpa [#allocation4], 1
    %s1336 = scalar_lea.sflag [#allocation4], 1
    %1337 = vsyncpa %s1336, 1

</llo_original>
